<compile_context>
chip_gen: v6e
topology: v6e:2x2x1
jax: 0.10.0
libtpu: 0.0.40
codegen_flags: <defaults>
</compile_context>

<pallas_src>
import functools
import math

import jax
import jax.numpy as jnp
import numpy as np
from jax import lax
from jax.experimental import pallas as pl
from jax.experimental.pallas import tpu as pltpu

LANE = 128
SUBLANE = 8
MAX_TILE_ROWS = 4096            # (4096, 128) f32 tile = 2 MiB; 3 in x 2 bufs = 12 MiB VMEM
NUM_SPLITS = 2                  # leading "parallel" axis (v7x megacore); near-free elsewhere
DEFAULT_MIN_KERNEL_ELEMS = 65536


def _mart_kernel(p_ref, pa_ref, t_ref, out_ref, *, lam, eps, acc_rows,
                 tile_rows, tiles_per_split, rows_valid, need_mask):
    # out_ref: (acc_rows, 128) f32 partial-sum accumulator, resident across the
    # reduction axis (grid axis 1) because its index_map ignores j.
    @pl.when(pl.program_id(1) == 0)
    def _():
        out_ref[...] = jnp.zeros_like(out_ref)

    p = p_ref[...]    # y_pred       [tile_rows, 128] f32
    pa = pa_ref[...]  # y_pred_adv   [tile_rows, 128] f32
    t = t_ref[...]    # y_true       [tile_rows, 128] f32

    one_m_p = 1.0 - p
    one_m_pa = 1.0 - pa

    # ---- BCE(y_pred_adv, y_true); PyTorch clamps each log term at -100 ----
    log_pa = jnp.maximum(jnp.log(pa), -100.0)
    log_1mpa = jnp.maximum(jnp.log(one_m_pa), -100.0)
    bce = t * log_pa + (1.0 - t) * log_1mpa        # note: negation folded below

    # ---- KLDiv(log(y_prob_adv + eps), y_prob) summed over the 2 classes ----
    # pointwise kl_div: xlogy(target, target) - target * input
    def xlogy(x):
        # 0 * log(0) -> 0 (select keeps the NaN branch from leaking).
        return jnp.where(x == 0.0, 0.0, x * jnp.log(x))

    kl = (xlogy(p) - p * jnp.log(pa + eps)
          + xlogy(one_m_p) - one_m_p * jnp.log(one_m_pa + eps))
    rob = kl * jnp.abs(t - p)

    # Fused contribution to both means (BCE sign folded into the combine).
    contrib = lam * rob - bce                      # [tile_rows, 128]

    if need_mask:
        # Zero out rows past the true data extent (block overhang past the end
        # of the array and/or the clamped redundant tile read garbage/repeats).
        start = (pl.program_id(0) * tiles_per_split + pl.program_id(1)) * tile_rows
        row_ids = start + lax.broadcasted_iota(jnp.int32, contrib.shape, 0)
        contrib = jnp.where(row_ids < rows_valid, contrib, 0.0)

    # Fold sublane groups into the (acc_rows, 128) accumulator: pure VPU adds,
    # no XLU; acc_rows independent sublane chains keep the fold off the
    # latency critical path.
    out_ref[...] += contrib.reshape(-1, acc_rows, LANE).sum(axis=0)


def _mart_loss_ref(y_pred, y_pred_adv, y_true, Lambda=6.0, eps=1e-12):
    """Pure-JAX reference mirroring the PyTorch forward exactly."""
    p = jnp.asarray(y_pred, jnp.float32)
    pa = jnp.asarray(y_pred_adv, jnp.float32)
    t = jnp.asarray(y_true, jnp.float32)
    bce = -(t * jnp.maximum(jnp.log(pa), -100.0)
            + (1.0 - t) * jnp.maximum(jnp.log(1.0 - pa), -100.0))
    adv_loss = jnp.mean(bce)
    y_prob = jnp.concatenate([p, 1.0 - p], axis=-1)
    y_prob_adv = jnp.concatenate([pa, 1.0 - pa], axis=-1)
    log_in = jnp.log(y_prob_adv + eps)
    kl = jnp.where(y_prob == 0.0, 0.0, y_prob * jnp.log(y_prob)) - y_prob * log_in
    rob = jnp.sum(kl, axis=1, keepdims=True) * jnp.abs(t - p)
    return adv_loss + Lambda * jnp.mean(rob)


def mart_loss(y_pred, y_pred_adv, y_true, Lambda=6.0, eps=1e-12, *,
              min_kernel_elems=DEFAULT_MIN_KERNEL_ELEMS,
              max_tile_rows=MAX_TILE_ROWS):
    """y_pred, y_pred_adv, y_true: [N, 1] probabilities / labels (as in PyTorch)."""
    n = int(math.prod(y_pred.shape))

    # Small-N fast path: pallas_call launch + grid bookkeeping dominate there.
    if n < min_kernel_elems:
        return _mart_loss_ref(y_pred, y_pred_adv, y_true, Lambda, eps)

    # --- geometry: lane/sublane-dense (rows, 128) view, minimal padding ---
    pad_quantum = SUBLANE * LANE                       # 1024 elems
    n_pad = -(-n // pad_quantum) * pad_quantum         # zero-copy when already aligned
    rows = n_pad // LANE                               # multiple of 8
    tile_rows = min(max_tile_rows, rows)               # multiple of 8 (or == rows)
    acc_rows = 32 if tile_rows % 32 == 0 else SUBLANE
    tiles_total = -(-rows // tile_rows)
    num_splits = NUM_SPLITS if tiles_total >= NUM_SPLITS else 1
    tiles_per_split = -(-tiles_total // num_splits)
    covered_rows = num_splits * tiles_per_split * tile_rows
    need_mask = covered_rows > rows                    # overhang and/or redundant tile

    def prep(x):
        x = jnp.asarray(x, jnp.float32).reshape(-1)
        if n_pad != n:
            # Zero tail (<= 1023 elems) contributes exactly 0 to bce and rob.
            # TODO(synk): a fully copy-free path for lane-unaligned N would need
            # manual DMA from the raw (N,1) HBM ref; align N caller-side instead.
            x = jnp.pad(x, (0, n_pad - n))
        return x.reshape(rows, LANE)

    p2, pa2, t2 = prep(y_pred), prep(y_pred_adv), prep(y_true)

    kernel = functools.partial(
        _mart_kernel, lam=float(Lambda), eps=float(eps), acc_rows=acc_rows,
        tile_rows=tile_rows, tiles_per_split=tiles_per_split,
        rows_valid=rows, need_mask=need_mask)

    last_tile = tiles_total - 1
    if num_splits * tiles_per_split == tiles_total:
        in_index_map = lambda c, j: (c * tiles_per_split + j, 0)
    else:
        # Clamp the (at most one) fully-redundant block onto the last valid
        # tile; the kernel's row mask zeroes its contribution.
        in_index_map = lambda c, j: (jnp.minimum(c * tiles_per_split + j, last_tile), 0)

    in_spec = pl.BlockSpec((tile_rows, LANE), in_index_map)
    # Lane-dense (acc_rows, 128) partial-sum block per split; unmasked stores.
    out_spec = pl.BlockSpec((acc_rows, LANE), lambda c, j: (c, 0))

    partials = pl.pallas_call(
        kernel,
        out_shape=jax.ShapeDtypeStruct((num_splits * acc_rows, LANE), jnp.float32),
        grid=(num_splits, tiles_per_split),
        in_specs=[in_spec, in_spec, in_spec],
        out_specs=out_spec,
        compiler_params=pltpu.CompilerParams(
            dimension_semantics=("parallel", "arbitrary"),
            vmem_limit_bytes=32 * 1024 * 1024),
    )(p2, pa2, t2)

    # Final tiny cross-lane reduce + single divide by the true N (fuses both means).
    return jnp.sum(partials) / jnp.float32(n)


if __name__ == "__main__":
    key = jax.random.PRNGKey(0)

    def make_inputs(n, key):
        k1, k2, k3 = jax.random.split(key, 3)
        y_pred = jax.nn.sigmoid(jax.random.normal(k1, (n, 1), jnp.float32))
        y_pred_adv = jax.nn.sigmoid(jax.random.normal(k2, (n, 1), jnp.float32))
        y_true = jax.random.bernoulli(k3, 0.5, (n, 1)).astype(jnp.float32)
        return y_pred, y_pred_adv, y_true

    # Case 1: N not a multiple of 128 (exercises the small tail pad), single
    # tile, kernel path forced (default dispatch would use the small-N path).
    yp, ypa, yt = make_inputs(2000, key)
    loss1 = jax.block_until_ready(mart_loss(yp, ypa, yt, Lambda=6.0, min_kernel_elems=0))
    ref1 = jax.block_until_ready(_mart_loss_ref(yp, ypa, yt, Lambda=6.0))
    np.testing.assert_allclose(np.asarray(loss1), np.asarray(ref1), rtol=5e-5, atol=1e-5)

    # Case 2: small max_tile_rows forces multi-tile grid, both splits, the
    # clamped index_map and the in-kernel row mask.
    yp2, ypa2, yt2 = make_inputs(3000, jax.random.PRNGKey(1))
    loss2 = jax.block_until_ready(
        mart_loss(yp2, ypa2, yt2, Lambda=6.0, min_kernel_elems=0, max_tile_rows=8))
    ref2 = jax.block_until_ready(_mart_loss_ref(yp2, ypa2, yt2, Lambda=6.0))
    np.testing.assert_allclose(np.asarray(loss2), np.asarray(ref2), rtol=5e-5, atol=1e-5)

    # Case 3: default dispatch (small-N fast path, pure JAX).
    loss3 = jax.block_until_ready(mart_loss(yp, ypa, yt, Lambda=6.0))
    np.testing.assert_allclose(np.asarray(loss3), np.asarray(ref1), rtol=5e-5, atol=1e-5)

    print("KERNEL_OK")
</pallas_src>

<mosaic_0001>
module attributes {stable_mosaic.version = 11 : i64} {
  func.func @_mart_kernel(%arg0: i32, %arg1: i32, %arg2: memref<16x128xf32, #tpu.memory_space<vmem>>, %arg3: memref<16x128xf32, #tpu.memory_space<vmem>>, %arg4: memref<16x128xf32, #tpu.memory_space<vmem>>, %arg5: memref<8x128xf32, #tpu.memory_space<vmem>>) attributes {dimension_semantics = [#tpu.dimension_semantics<parallel>, #tpu.dimension_semantics<arbitrary>], iteration_bounds = array<i64: 1, 1>, scalar_prefetch = 0 : i64, scratch_operands = 0 : i64, tpu.core_type = #tpu.core_type<tc>, window_params = [{transform_indices = @transform_0, window_bounds = array<i64: 16, 128>}, {transform_indices = @transform_1, window_bounds = array<i64: 16, 128>}, {transform_indices = @transform_2, window_bounds = array<i64: 16, 128>}, {transform_indices = @transform_3, window_bounds = array<i64: 8, 128>}]} {
    %c0_i32 = arith.constant 0 : i32
    %0 = arith.cmpi eq, %arg1, %c0_i32 : i32
    %1 = arith.extui %0 : i1 to i32
    %c0_i32_0 = arith.constant 0 : i32
    %2 = arith.cmpi ne, %1, %c0_i32_0 : i32
    scf.if %2 {
      %cst_22 = arith.constant 0.000000e+00 : f32
      %55 = vector.broadcast %cst_22 : f32 to vector<8x128xf32>
      %c0_23 = arith.constant 0 : index
      %c0_24 = arith.constant 0 : index
      %56 = vector.load %arg5[%c0_23, %c0_24] : memref<8x128xf32, #tpu.memory_space<vmem>>, vector<8x128xf32>
      tpu.vector_store %arg5[%c0_23, %c0_24], %55 {strides = array<i32>} : memref<8x128xf32, #tpu.memory_space<vmem>>, vector<8x128xf32>,
    } else {
    }
    %c0 = arith.constant 0 : index
    %c0_1 = arith.constant 0 : index
    %3 = vector.load %arg2[%c0, %c0_1] : memref<16x128xf32, #tpu.memory_space<vmem>>, vector<16x128xf32>
    %c0_2 = arith.constant 0 : index
    %c0_3 = arith.constant 0 : index
    %4 = vector.load %arg3[%c0_2, %c0_3] : memref<16x128xf32, #tpu.memory_space<vmem>>, vector<16x128xf32>
    %c0_4 = arith.constant 0 : index
    %c0_5 = arith.constant 0 : index
    %5 = vector.load %arg4[%c0_4, %c0_5] : memref<16x128xf32, #tpu.memory_space<vmem>>, vector<16x128xf32>
    %cst = arith.constant 1.000000e+00 : f32
    %6 = vector.broadcast %cst : f32 to vector<16x128xf32>
    %7 = arith.subf %6, %3 : vector<16x128xf32>
    %cst_6 = arith.constant 1.000000e+00 : f32
    %8 = vector.broadcast %cst_6 : f32 to vector<16x128xf32>
    %9 = arith.subf %8, %4 : vector<16x128xf32>
    %10 = math.log %4 : vector<16x128xf32>
    %cst_7 = arith.constant -1.000000e+02 : f32
    %11 = vector.broadcast %cst_7 : f32 to vector<16x128xf32>
    %12 = arith.maximumf %10, %11 : vector<16x128xf32>
    %13 = math.log %9 : vector<16x128xf32>
    %cst_8 = arith.constant -1.000000e+02 : f32
    %14 = vector.broadcast %cst_8 : f32 to vector<16x128xf32>
    %15 = arith.maximumf %13, %14 : vector<16x128xf32>
    %16 = arith.mulf %5, %12 : vector<16x128xf32>
    %cst_9 = arith.constant 1.000000e+00 : f32
    %17 = vector.broadcast %cst_9 : f32 to vector<16x128xf32>
    %18 = arith.subf %17, %5 : vector<16x128xf32>
    %19 = arith.mulf %18, %15 : vector<16x128xf32>
    %20 = arith.addf %16, %19 : vector<16x128xf32>
    %cst_10 = arith.constant 0.000000e+00 : f32
    %21 = vector.broadcast %cst_10 : f32 to vector<16x128xf32>
    %22 = arith.cmpf oeq, %3, %21 : vector<16x128xf32>
    %23 = math.log %3 : vector<16x128xf32>
    %24 = arith.mulf %3, %23 : vector<16x128xf32>
    %cst_11 = arith.constant 0.000000e+00 : f32
    %25 = vector.broadcast %cst_11 : f32 to vector<16x128xf32>
    %26 = arith.select %22, %25, %24 : vector<16x128xi1>, vector<16x128xf32>
    %cst_12 = arith.constant 9.99999996E-13 : f32
    %27 = vector.broadcast %cst_12 : f32 to vector<16x128xf32>
    %28 = arith.addf %4, %27 : vector<16x128xf32>
    %29 = math.log %28 : vector<16x128xf32>
    %30 = arith.mulf %3, %29 : vector<16x128xf32>
    %31 = arith.subf %26, %30 : vector<16x128xf32>
    %cst_13 = arith.constant 0.000000e+00 : f32
    %32 = vector.broadcast %cst_13 : f32 to vector<16x128xf32>
    %33 = arith.cmpf oeq, %7, %32 : vector<16x128xf32>
    %34 = math.log %7 : vector<16x128xf32>
    %35 = arith.mulf %7, %34 : vector<16x128xf32>
    %cst_14 = arith.constant 0.000000e+00 : f32
    %36 = vector.broadcast %cst_14 : f32 to vector<16x128xf32>
    %37 = arith.select %33, %36, %35 : vector<16x128xi1>, vector<16x128xf32>
    %38 = arith.addf %31, %37 : vector<16x128xf32>
    %cst_15 = arith.constant 9.99999996E-13 : f32
    %39 = vector.broadcast %cst_15 : f32 to vector<16x128xf32>
    %40 = arith.addf %9, %39 : vector<16x128xf32>
    %41 = math.log %40 : vector<16x128xf32>
    %42 = arith.mulf %7, %41 : vector<16x128xf32>
    %43 = arith.subf %38, %42 : vector<16x128xf32>
    %44 = arith.subf %5, %3 : vector<16x128xf32>
    %45 = math.absf %44 : vector<16x128xf32>
    %46 = arith.mulf %43, %45 : vector<16x128xf32>
    %cst_16 = arith.constant 6.000000e+00 : f32
    %47 = vector.broadcast %cst_16 : f32 to vector<16x128xf32>
    %48 = arith.mulf %47, %46 : vector<16x128xf32>
    %49 = arith.subf %48, %20 : vector<16x128xf32>
    %c0_17 = arith.constant 0 : index
    %c0_18 = arith.constant 0 : index
    %50 = vector.load %arg5[%c0_17, %c0_18] : memref<8x128xf32, #tpu.memory_space<vmem>>, vector<8x128xf32>
    %51 = vector.shape_cast %49 : vector<16x128xf32> to vector<2x8x128xf32>
    %cst_19 = arith.constant dense<0.000000e+00> : vector<8x128xf32>
    %52 = vector.multi_reduction <add>, %51, %cst_19 [0] : vector<2x8x128xf32> to vector<8x128xf32>
    %53 = arith.addf %50, %52 : vector<8x128xf32>
    %c0_20 = arith.constant 0 : index
    %c0_21 = arith.constant 0 : index
    %54 = vector.load %arg5[%c0_20, %c0_21] : memref<8x128xf32, #tpu.memory_space<vmem>>, vector<8x128xf32>
    tpu.vector_store %arg5[%c0_20, %c0_21], %53 {strides = array<i32>} : memref<8x128xf32, #tpu.memory_space<vmem>>, vector<8x128xf32>,
    return
  }
  func.func @transform_0(%arg0: i32, %arg1: i32) -> (i32, i32) {
    %c1_i32 = arith.constant 1 : i32
    %0 = arith.muli %arg0, %c1_i32 : i32
    %1 = arith.addi %0, %arg1 : i32
    %c0_i32 = arith.constant 0 : i32
    %c0_i32_0 = arith.constant 0 : i32
    return %1, %c0_i32 : i32, i32
  }
  func.func @transform_1(%arg0: i32, %arg1: i32) -> (i32, i32) {
    %c1_i32 = arith.constant 1 : i32
    %0 = arith.muli %arg0, %c1_i32 : i32
    %1 = arith.addi %0, %arg1 : i32
    %c0_i32 = arith.constant 0 : i32
    %c0_i32_0 = arith.constant 0 : i32
    return %1, %c0_i32 : i32, i32
  }
  func.func @transform_2(%arg0: i32, %arg1: i32) -> (i32, i32) {
    %c1_i32 = arith.constant 1 : i32
    %0 = arith.muli %arg0, %c1_i32 : i32
    %1 = arith.addi %0, %arg1 : i32
    %c0_i32 = arith.constant 0 : i32
    %c0_i32_0 = arith.constant 0 : i32
    return %1, %c0_i32 : i32, i32
  }
  func.func @transform_3(%arg0: i32, %arg1: i32) -> (i32, i32) {
    %c0_i32 = arith.constant 0 : i32
    %c0_i32_0 = arith.constant 0 : i32
    return %arg0, %c0_i32 : i32, i32
  }
}

</mosaic_0001>

<llo_original>
// kernel: tpu_custom_call.1
$region0: #{tpu_custom_call.1}
  #allocation0 [shape = 'u32[]', space=smem, size = 0x4, offset = 0x4, fixed_abs, tag = 'smem constant byte address 0x4 - core index']
  #allocation1 [shape = 'u32[144,128]{1,0:T(1,128)}', space=vmem, size = 0x12000, scoped, tag = 'internal scratch']
  %s0 = inlined_call_operand.hbm [shape: f32[16,128], index: 0, kind: input, shape index: {}]
  %s1 = inlined_call_operand.hbm [shape: f32[16,128], index: 1, kind: input, shape index: {}]
  %s2 = inlined_call_operand.hbm [shape: f32[16,128], index: 2, kind: input, shape index: {}]
  %s3 = inlined_call_operand.hbm [shape: f32[8,128], index: 3, kind: output, shape index: {}]
  %s4 = sld [smem:[#allocation0]]
  $region38: #{tpu_custom_call.1} parent=0
    _
  %s6 = ssub.s32 1, %s4
  %s7 = scalar_select 0, %s6, %s4
  $region1: #{tpu_custom_call.1} parent=0
    #allocation2 [shape = 'u8[8192]{0}', space=vmem, size = 0x2000, scoped, tag = 'input window, operand 0, single buffered']
    #allocation3 [shape = 's32[1]{0}', space=sflag, size = 0x4, scoped, tag = 'scoped memory for tpu_custom_call.1']
    #allocation4 [shape = 's32[1]{0}', space=sflag, size = 0x4, scoped, tag = 'scoped memory for tpu_custom_call.1']
    #allocation5 [shape = 'u8[8192]{0}', space=vmem, size = 0x2000, scoped, tag = 'input window, operand 1, single buffered']
    #allocation6 [shape = 's32[1]{0}', space=sflag, size = 0x4, scoped, tag = 'scoped memory for tpu_custom_call.1']
    #allocation7 [shape = 'u8[8192]{0}', space=vmem, size = 0x2000, scoped, tag = 'input window, operand 2, single buffered']
    #allocation8 [shape = 'u8[4096]{0}', space=vmem, size = 0x1000, scoped, tag = 'output window, operand 0, single buffered']
    %8 = vsyncpa [#allocation3], 0
    %9 = vsyncpa [#allocation6], 0
    %10 = vsyncpa [#allocation4], 0
    // Predicated region
    $region2: #{tpu_custom_call.1} parent=1 // pred_check
      _
    $region3: #{tpu_custom_call.1} parent=1 // pred_check_branch
      %12 = sbr.rel (0) target = $region5
    $region4: #{tpu_custom_call.1} parent=1 // pred_region
      %s13 = sadd.s32 0, 0
      %s14 = smul.u32 2, %s13
      %s16 = ssub.s32 256, 256
      %17 = vsyncadd [#allocation3], %s16
      %s18 = smul.addr %s14, 128
      %s19 = scalar_lea.hbm %s0, %s18
      %s20 = sshll.u32 [#allocation2], 4
      %s21 = int_to_ptr.vmem [resolvable:$true] %s20
      %26 = dma.hbm_to_vmem [thread:$0]  %s19, 256, %s21, [#allocation3], 128, 128, 8
    $region5: #{tpu_custom_call.1} parent=1 // pred_fallthru
      _
    // Predicated region
    $region6: #{tpu_custom_call.1} parent=1 // pred_check
      _
    $region7: #{tpu_custom_call.1} parent=1 // pred_check_branch
      %28 = sbr.rel (0) target = $region9
    $region8: #{tpu_custom_call.1} parent=1 // pred_region
      %s29 = sadd.s32 0, 0
      %s30 = smul.u32 2, %s29
      %s32 = ssub.s32 256, 256
      %33 = vsyncadd [#allocation6], %s32
      %s34 = smul.addr %s30, 128
      %s35 = scalar_lea.hbm %s1, %s34
      %s36 = sshll.u32 [#allocation5], 4
      %s37 = int_to_ptr.vmem [resolvable:$true] %s36
      %42 = dma.hbm_to_vmem [thread:$0]  %s35, 256, %s37, [#allocation6], 128, 128, 8
    $region9: #{tpu_custom_call.1} parent=1 // pred_fallthru
      _
    // Predicated region
    $region10: #{tpu_custom_call.1} parent=1 // pred_check
      _
    $region11: #{tpu_custom_call.1} parent=1 // pred_check_branch
      %44 = sbr.rel (0) target = $region13
    $region12: #{tpu_custom_call.1} parent=1 // pred_region
      %s45 = sadd.s32 0, 0
      %s46 = smul.u32 2, %s45
      %s48 = ssub.s32 256, 256
      %49 = vsyncadd [#allocation6], %s48
      %s50 = smul.addr %s46, 128
      %s51 = scalar_lea.hbm %s2, %s50
      %s52 = sshll.u32 [#allocation7], 4
      %s53 = int_to_ptr.vmem [resolvable:$true] %s52
      %58 = dma.hbm_to_vmem [thread:$0]  %s51, 256, %s53, [#allocation6], 128, 128, 8
    $region13: #{tpu_custom_call.1} parent=1 // pred_fallthru
      _
    // Predicated region
    $region14: #{tpu_custom_call.1} parent=1 // pred_check
      _
    $region15: #{tpu_custom_call.1} parent=1 // pred_check_branch
      %60 = sbr.rel (0) target = $region17
    $region16: #{tpu_custom_call.1} parent=1 // pred_region
      %61 = dma.done [#allocation3], 256
    $region17: #{tpu_custom_call.1} parent=1 // pred_fallthru
      _
    // Predicated region
    $region18: #{tpu_custom_call.1} parent=1 // pred_check
      _
    $region19: #{tpu_custom_call.1} parent=1 // pred_check_branch
      %63 = sbr.rel (0) target = $region21
    $region20: #{tpu_custom_call.1} parent=1 // pred_region
      %64 = dma.done [#allocation6], 256
    $region21: #{tpu_custom_call.1} parent=1 // pred_fallthru
      _
    // Predicated region
    $region22: #{tpu_custom_call.1} parent=1 // pred_check
      _
    $region23: #{tpu_custom_call.1} parent=1 // pred_check_branch
      %66 = sbr.rel (0) target = $region25
    $region24: #{tpu_custom_call.1} parent=1 // pred_region
      %67 = dma.done [#allocation6], 256
    $region25: #{tpu_custom_call.1} parent=1 // pred_fallthru
      _
    %s68 = sadd.s32 0, 0
    %s69 = smul.u32 2, %s68
    %s70 = sadd.s32 0, 0
    %s71 = smul.u32 2, %s70
    %s72 = sadd.s32 0, 0
    %s73 = smul.u32 2, %s72
    %p74 = scmp.eq.s32.totalorder 0, 0
    // Predicated region
    $region26: #{tpu_custom_call.1} parent=1 // pred_check
      %p75 = pneg %p74
    $region27: #{tpu_custom_call.1} parent=1 // pred_check_branch
      %77 = sbr.rel (%p75) target = $region29
    $region28: #{tpu_custom_call.1} parent=1 // pred_region
      %78 = vst [vmem:[#allocation8] sm:$0xff] 0.0
    $region29: #{tpu_custom_call.1} parent=1 // pred_fallthru
      _
    %v79 = vld [vmem:[#allocation2] sm:$0xff]
    %v80 = vld [vmem:[#allocation2 + $0x8] sm:$0xff]
    %v81 = vld [vmem:[#allocation5] sm:$0xff]
    %v82 = vld [vmem:[#allocation5 + $0x8] sm:$0xff]
    %v83 = vld [vmem:[#allocation7] sm:$0xff]
    %v84 = vld [vmem:[#allocation7 + $0x8] sm:$0xff]
    %v85 = vsub.f32 1.0, %v79
    %v86 = vsub.f32 1.0, %v80
    %v87 = vsub.f32 1.0, %v81
    %v88 = vsub.f32 1.0, %v82
    %v89 = vlog2.pop %v81
    %v90 = vmul.f32 %v89, 0.6931472
    %v91 = vlog2.pop %v82
    %v92 = vmul.f32 %v91, 0.6931472
    %v93 = vmax.f32 %v90, -100.0
    %v94 = vmax.f32 %v92, -100.0
    %v95 = vlog2.pop %v87
    %v96 = vmul.f32 %v95, 0.6931472
    %v97 = vlog2.pop %v88
    %v98 = vmul.f32 %v97, 0.6931472
    %v99 = vmax.f32 %v96, -100.0
    %v100 = vmax.f32 %v98, -100.0
    %v101 = vmul.f32 %v83, %v93
    %v102 = vmul.f32 %v84, %v94
    %v103 = vsub.f32 1.0, %v83
    %v104 = vsub.f32 1.0, %v84
    %v105 = vmul.f32 %v103, %v99
    %v106 = vmul.f32 %v104, %v100
    %v107 = vadd.f32 %v101, %v105
    %v108 = vadd.f32 %v102, %v106
    %vm109 = vcmp.eq.f32.partialorder %v79, 0.0
    %vm110 = vcmp.eq.f32.partialorder %v80, 0.0
    %v111 = vlog2.pop %v79
    %v112 = vmul.f32 %v111, 0.6931472
    %v113 = vlog2.pop %v80
    %v114 = vmul.f32 %v113, 0.6931472
    %v115 = vmul.f32 %v79, %v112
    %v116 = vmul.f32 %v80, %v114
    %v117 = vsel %vm109, 0.0, %v115
    %v118 = vsel %vm110, 0.0, %v116
    %v119 = vadd.f32 %v81, 1e-12
    %v120 = vadd.f32 %v82, 1e-12
    %v121 = vlog2.pop %v119
    %v122 = vmul.f32 %v121, 0.6931472
    %v123 = vlog2.pop %v120
    %v124 = vmul.f32 %v123, 0.6931472
    %v125 = vmul.f32 %v79, %v122
    %v126 = vmul.f32 %v80, %v124
    %v127 = vsub.f32 %v117, %v125
    %v128 = vsub.f32 %v118, %v126
    %vm129 = vcmp.eq.f32.partialorder %v85, 0.0
    %vm130 = vcmp.eq.f32.partialorder %v86, 0.0
    %v131 = vlog2.pop %v85
    %v132 = vmul.f32 %v131, 0.6931472
    %v133 = vlog2.pop %v86
    %v134 = vmul.f32 %v133, 0.6931472
    %v135 = vmul.f32 %v85, %v132
    %v136 = vmul.f32 %v86, %v134
    %v137 = vsel %vm129, 0.0, %v135
    %v138 = vsel %vm130, 0.0, %v136
    %v139 = vadd.f32 %v127, %v137
    %v140 = vadd.f32 %v128, %v138
    %v141 = vadd.f32 %v87, 1e-12
    %v142 = vadd.f32 %v88, 1e-12
    %v143 = vlog2.pop %v141
    %v144 = vmul.f32 %v143, 0.6931472
    %v145 = vlog2.pop %v142
    %v146 = vmul.f32 %v145, 0.6931472
    %v147 = vmul.f32 %v85, %v144
    %v148 = vmul.f32 %v86, %v146
    %v149 = vsub.f32 %v139, %v147
    %v150 = vsub.f32 %v140, %v148
    %v151 = vsub.f32 %v83, %v79
    %v152 = vsub.f32 %v84, %v80
    %v153 = vand.u32 2147483647, %v151
    %v154 = vand.u32 2147483647, %v152
    %v155 = vmul.f32 %v149, %v153
    %v156 = vmul.f32 %v150, %v154
    %v157 = vmul.f32 %v155, 6.0
    %v158 = vmul.f32 %v156, 6.0
    %v159 = vsub.f32 %v157, %v107
    %v160 = vsub.f32 %v158, %v108
    %v161 = vld [vmem:[#allocation8] sm:$0xff]
    %v162 = vadd.f32 %v159, %v160
    %v163 = vadd.f32 %v161, %v162
    %164 = vst [vmem:[#allocation8] sm:$0xff] %v163
    // Predicated region
    $region30: #{tpu_custom_call.1} parent=1 // pred_check
      _
    $region31: #{tpu_custom_call.1} parent=1 // pred_check_branch
      %166 = sbr.rel (0) target = $region33
    $region32: #{tpu_custom_call.1} parent=1 // pred_region
      %s168 = ssub.s32 128, 128
      %169 = vsyncadd [#allocation4], %s168
      %s171 = sshll.u32 [#allocation8], 4
      %s172 = int_to_ptr.vmem [resolvable:$true] %s171
      %174 = dma.vmem_to_hbm [thread:$0]  %s172, 128, %s3, [#allocation4]
    $region33: #{tpu_custom_call.1} parent=1 // pred_fallthru
      _
    // Predicated region
    $region34: #{tpu_custom_call.1} parent=1 // pred_check
      _
    $region35: #{tpu_custom_call.1} parent=1 // pred_check_branch
      %176 = sbr.rel (0) target = $region37
    $region36: #{tpu_custom_call.1} parent=1 // pred_region
      %177 = dma.done [#allocation4], 128
    $region37: #{tpu_custom_call.1} parent=1 // pred_fallthru
      _
    %178 = vsyncpa [#allocation3], 1
    %179 = vsyncpa [#allocation6], 1
    %180 = vsyncpa [#allocation4], 1

</llo_original>
